<compile_context>
chip_gen: v6e
topology: v6e:2x2x1
jax: 0.10.0
libtpu: 0.0.40
codegen_flags: <defaults>
</compile_context>

<pallas_src>
import functools

import jax
import jax.numpy as jnp
from jax import lax
from jax.experimental import pallas as pl
from jax.experimental.pallas import tpu as pltpu


# --------------------------------------------------------------------------
# Pallas kernel
# --------------------------------------------------------------------------
def _djau_kernel(x_ref, w1_ref, wfc1_ref, p_ref, pool_ref, exp_ref, o_ref, *,
                 dilation, d_p, dd_p, d_k, dd_k, hidden, L, Lp, P):
    C, BLp = x_ref.shape                 # BLp == Bt * Lp (padded lane-dense slab)
    xb = x_ref[...]                      # (C, BLp) float32, zero on pad lanes
    p = p_ref[...]                       # (C, d_k + dd_k + 3 + hidden) packed params

    # --- unpack packed per-channel parameters (static lane slices) ---
    o = 0
    w0 = p[:, o:o + d_k]; o += d_k            # conv0 depthwise weight   (C, d_k)
    wsp = p[:, o:o + dd_k]; o += dd_k          # conv_spatial dw weight   (C, dd_k)
    b0 = p[:, o:o + 1]; o += 1                 # conv0 bias               (C, 1)
    bsp = p[:, o:o + 1]; o += 1                # conv_spatial bias        (C, 1)
    b1 = p[:, o:o + 1]; o += 1                 # conv1 bias               (C, 1)
    wfc2 = p[:, o:o + hidden]                  # fc2 weight               (C, hidden)

    # --- data-lane mask: built ONCE per grid step (not per tap) ---
    lane = lax.broadcasted_iota(jnp.int32, (C, BLp), 1)
    pos = lane % Lp
    in_data = jnp.logical_and(pos >= P, pos < P + L)

    def dw_conv(a, w, bias, K, dil, pad):
        """Depthwise conv along L via plain weighted lane rotations.

        `a` is zero on pad lanes and P >= |k*dil - pad| for every tap, so a
        rolled tap never reaches a neighbouring segment's data: it reads
        either in-segment data or in-segment zero padding.  No per-tap mask.
        """
        acc = jnp.zeros((C, BLp), jnp.float32)
        for k in range(K):
            off = k * dil - pad
            shifted = pltpu.roll(a, shift=(-off) % BLp, axis=1)  # shifted[l] = a[(l+off) mod BLp]
            acc = acc + w[:, k:k + 1] * shifted
        # Add bias on data lanes only and re-zero pad lanes so the NEXT conv
        # also sees zero padding (single where per conv stage).
        return jnp.where(in_data, acc + bias, 0.0)

    # attn = conv_spatial(conv0(x))   -- two depthwise convs
    attn = dw_conv(xb, w0, b0, d_k, 1, d_p)
    attn = dw_conv(attn, wsp, bsp, dd_k, dilation, dd_p)

    # f_x = conv1(attn) -- pointwise conv as ONE matmul over all columns
    f_x = jnp.dot(w1_ref[...], attn, preferred_element_type=jnp.float32) + b1

    # --- SE branch, batched over the Bt segments of this tile ---
    # Segment-mean pooling with the PRECOMPUTED (BLp, Bt) pooling matrix
    # (pad lanes of xb are zero, so the /L normalization is exact).
    s = jnp.dot(xb, pool_ref[...], preferred_element_type=jnp.float32)           # (C, Bt)
    h = jnp.maximum(
        jnp.dot(wfc1_ref[...], s, preferred_element_type=jnp.float32), 0.0)      # (hidden, Bt)
    se = jax.nn.sigmoid(
        jnp.dot(wfc2, h, preferred_element_type=jnp.float32))                    # (C, Bt)
    # Expand (C, Bt) -> (C, BLp) with the PRECOMPUTED (Bt, BLp) one-hot matrix.
    se_full = jnp.dot(se, exp_ref[...], preferred_element_type=jnp.float32)      # (C, BLp)

    # return se_atten * f_x * u ; pad lanes of xb are zero -> output pads zero.
    o_ref[...] = se_full * f_x * xb


# --------------------------------------------------------------------------
# Wrapper
# --------------------------------------------------------------------------
def _pick_batch_tile(B, Lp, max_lanes=8192):
    """Largest divisor of B whose lane extent is 128-aligned and <= max_lanes.

    Keeps stores lane-dense/unmasked, bounds the per-block VMEM working set
    (important for v7x's 64 MiB / v5e's 16 MiB scoped default), and yields
    >=2 grid tiles for large batches so the "parallel" axis can shard across
    v7x's two TensorCores.  Falls back to the full batch (full-extent lane
    block, always legal) for tiny problems.
    """
    best = None
    for bt in range(1, B + 1):
        if B % bt:
            continue
        lanes = bt * Lp
        if lanes % 128 == 0 and lanes <= max_lanes:
            best = bt
    return best if best is not None else B


def djau_pallas(x, params, *, dilation, d_p, dd_p, batch_tile=None):
    B, C, L = x.shape
    w0, b0, wsp, bsp, w1, b1, wfc1, wfc2 = params
    d_k = w0.shape[1]
    dd_k = wsp.shape[1]
    hidden = wfc1.shape[0]

    # Segment pad width: must cover the largest |tap offset| of both convs.
    P = max(d_p, (d_k - 1) - d_p, dd_p, (dd_k - 1) * dilation - dd_p)
    Lp = L + 2 * P

    if batch_tile is None:
        batch_tile = _pick_batch_tile(B, Lp)
    assert B % batch_tile == 0
    n_tiles = B // batch_tile
    # Lane-dense stores: when tiling, require a 128-multiple lane block;
    # batch_tile == B (full extent) is always legal but may use partial stores.
    assert batch_tile == B or (batch_tile * Lp) % 128 == 0

    # Pack all small per-channel parameters into ONE operand (fewer DMAs).
    p_c = jnp.concatenate([w0, wsp, b0, bsp, b1, wfc2], axis=1)  # (C, d_k+dd_k+3+hidden)

    # Lane-dense padded slab: (B, C, L) -> (C, B*Lp), P zero lanes per side of
    # each length-L segment.
    # TODO(synk): when embedded in a larger network, keep activations in this
    # slab layout across adjacent ops instead of relayouting per call.
    x_pad = jnp.pad(x, ((0, 0), (0, 0), (P, P)))
    x_cl = jnp.transpose(x_pad, (1, 0, 2)).reshape(C, B * Lp)

    # Constant per-tile pooling / expansion matrices, hoisted OUT of the grid
    # body (Pallas does not CSE across grid steps).
    seg = jnp.arange(batch_tile * Lp, dtype=jnp.int32) // Lp
    cols = jnp.arange(batch_tile, dtype=jnp.int32)
    onehot = (seg[:, None] == cols[None, :]).astype(jnp.float32)  # (Bt*Lp, Bt)
    pool = onehot / float(L)                                      # (Bt*Lp, Bt)
    expand = jnp.transpose(onehot)                                # (Bt, Bt*Lp)

    kernel = functools.partial(
        _djau_kernel, dilation=dilation, d_p=d_p, dd_p=dd_p,
        d_k=d_k, dd_k=dd_k, hidden=hidden, L=L, Lp=Lp, P=P)

    out_cl = pl.pallas_call(
        kernel,
        out_shape=jax.ShapeDtypeStruct((C, B * Lp), jnp.float32),
        grid=(n_tiles,),
        in_specs=[
            pl.BlockSpec((C, batch_tile * Lp), lambda i: (0, i)),  # x slab tile
            pl.BlockSpec(w1.shape, lambda i: (0, 0)),              # 1x1 conv weight
            pl.BlockSpec(wfc1.shape, lambda i: (0, 0)),            # SE fc1 weight
            pl.BlockSpec(p_c.shape, lambda i: (0, 0)),             # packed small params
            pl.BlockSpec(pool.shape, lambda i: (0, 0)),            # hoisted pooling matrix
            pl.BlockSpec(expand.shape, lambda i: (0, 0)),          # hoisted expand matrix
        ],
        out_specs=pl.BlockSpec((C, batch_tile * Lp), lambda i: (0, i)),
        compiler_params=pltpu.CompilerParams(
            dimension_semantics=("parallel",)),   # batch-tile axis core-splittable on v7x
    )(x_cl, w1, wfc1, p_c, pool, expand)

    # Strip pads and restore (B, C, L).
    return out_cl.reshape(C, B, Lp)[:, :, P:P + L].transpose(1, 0, 2)


# --------------------------------------------------------------------------
# Pure-JAX reference (for correctness check)
# --------------------------------------------------------------------------
def djau_reference(x, params, *, dilation, d_p, dd_p):
    w0, b0, wsp, bsp, w1, b1, wfc1, wfc2 = params
    C = x.shape[1]

    def dwconv(a, w, b, dil, pad):
        out = lax.conv_general_dilated(
            a, w[:, None, :], window_strides=(1,), padding=[(pad, pad)],
            rhs_dilation=(dil,), dimension_numbers=("NCH", "OIH", "NCH"),
            feature_group_count=C)
        return out + b.reshape(1, C, 1)

    attn = dwconv(x, w0, b0[:, 0], 1, d_p)
    attn = dwconv(attn, wsp, bsp[:, 0], dilation, dd_p)
    f_x = jnp.einsum("oc,bcl->bol", w1, attn) + b1[:, 0][None, :, None]

    s = jnp.mean(x, axis=-1)                       # (B, C)
    h = jnp.maximum(s @ wfc1.T, 0.0)               # (B, C//r)
    se = jax.nn.sigmoid(h @ wfc2.T)                # (B, C)
    return se[:, :, None] * f_x * x


# --------------------------------------------------------------------------
# Main
# --------------------------------------------------------------------------
if __name__ == "__main__":
    # Module hyperparameters (matching DJAU.__init__)
    dim = 32
    kernel_size = 21
    dilation = 3
    reduction = 16

    d_k = 2 * dilation - 1                                              # 5
    d_p = (d_k - 1) // 2                                                # 2
    dd_k = kernel_size // dilation + (kernel_size // dilation % 2 - 1)  # 7
    dd_p = dilation * (dd_k - 1) // 2                                   # 9
    red = max(dim // reduction, 4)                                      # 4
    hidden = dim // red                                                 # 8

    B, C, L = 2, dim, 16

    key = jax.random.PRNGKey(0)
    ks = jax.random.split(key, 9)
    x = jax.random.normal(ks[0], (B, C, L), jnp.float32)

    # Deterministic synthetic parameters (shapes per nn.Module __init__)
    w0 = 0.1 * jax.random.normal(ks[1], (C, d_k), jnp.float32)      # conv0 depthwise weight
    b0 = 0.1 * jax.random.normal(ks[2], (C, 1), jnp.float32)        # conv0 bias
    wsp = 0.1 * jax.random.normal(ks[3], (C, dd_k), jnp.float32)    # conv_spatial depthwise weight
    bsp = 0.1 * jax.random.normal(ks[4], (C, 1), jnp.float32)       # conv_spatial bias
    w1 = 0.1 * jax.random.normal(ks[5], (C, C), jnp.float32)        # conv1 (1x1) weight
    b1 = 0.1 * jax.random.normal(ks[6], (C, 1), jnp.float32)        # conv1 bias
    wfc1 = 0.1 * jax.random.normal(ks[7], (hidden, C), jnp.float32) # Linear(dim, dim//red, bias=False)
    wfc2 = 0.1 * jax.random.normal(ks[8], (C, hidden), jnp.float32) # Linear(dim//red, dim, bias=False)

    params = (w0, b0, wsp, bsp, w1, b1, wfc1, wfc2)

    out = djau_pallas(x, params, dilation=dilation, d_p=d_p, dd_p=dd_p)
    out = jax.block_until_ready(out)

    ref = djau_reference(x, params, dilation=dilation, d_p=d_p, dd_p=dd_p)
    ref = jax.block_until_ready(ref)

    assert out.shape == (B, C, L)
    assert jnp.allclose(out, ref, rtol=1e-4, atol=1e-5), "mismatch vs reference"

    print("KERNEL_OK")
</pallas_src>

<mosaic_0001>
module attributes {stable_mosaic.version = 11 : i64} {
  func.func @_djau_kernel(%arg0: i32, %arg1: memref<32x68xf32, #tpu.memory_space<vmem>>, %arg2: memref<32x32xf32, #tpu.memory_space<vmem>>, %arg3: memref<8x32xf32, #tpu.memory_space<vmem>>, %arg4: memref<32x23xf32, #tpu.memory_space<vmem>>, %arg5: memref<68x2xf32, #tpu.memory_space<vmem>>, %arg6: memref<2x68xf32, #tpu.memory_space<vmem>>, %arg7: memref<32x68xf32, #tpu.memory_space<vmem>>) attributes {dimension_semantics = [#tpu.dimension_semantics<parallel>], iteration_bounds = array<i64: 1>, scalar_prefetch = 0 : i64, scratch_operands = 0 : i64, tpu.core_type = #tpu.core_type<tc>, window_params = [{transform_indices = @transform_0, window_bounds = array<i64: 32, 68>}, {pipeline_mode = #tpu.pipeline_mode<synchronous>, transform_indices = @transform_1, window_bounds = array<i64: 32, 32>}, {pipeline_mode = #tpu.pipeline_mode<synchronous>, transform_indices = @transform_2, window_bounds = array<i64: 8, 32>}, {pipeline_mode = #tpu.pipeline_mode<synchronous>, transform_indices = @transform_3, window_bounds = array<i64: 32, 23>}, {pipeline_mode = #tpu.pipeline_mode<synchronous>, transform_indices = @transform_4, window_bounds = array<i64: 68, 2>}, {pipeline_mode = #tpu.pipeline_mode<synchronous>, transform_indices = @transform_5, window_bounds = array<i64: 2, 68>}, {transform_indices = @transform_6, window_bounds = array<i64: 32, 68>}]} {
    %c0 = arith.constant 0 : index
    %c0_0 = arith.constant 0 : index
    %0 = vector.load %arg1[%c0, %c0_0] : memref<32x68xf32, #tpu.memory_space<vmem>>, vector<32x68xf32>
    %c0_1 = arith.constant 0 : index
    %c0_2 = arith.constant 0 : index
    %1 = vector.load %arg4[%c0_1, %c0_2] : memref<32x23xf32, #tpu.memory_space<vmem>>, vector<32x23xf32>
    %2 = vector.extract_strided_slice %1 {offsets = [0, 0], sizes = [32, 5], strides = [1, 1]} : vector<32x23xf32> to vector<32x5xf32>
    %3 = vector.extract_strided_slice %1 {offsets = [0, 5], sizes = [32, 7], strides = [1, 1]} : vector<32x23xf32> to vector<32x7xf32>
    %4 = vector.extract_strided_slice %1 {offsets = [0, 12], sizes = [32, 1], strides = [1, 1]} : vector<32x23xf32> to vector<32x1xf32>
    %5 = vector.extract_strided_slice %1 {offsets = [0, 13], sizes = [32, 1], strides = [1, 1]} : vector<32x23xf32> to vector<32x1xf32>
    %6 = vector.extract_strided_slice %1 {offsets = [0, 14], sizes = [32, 1], strides = [1, 1]} : vector<32x23xf32> to vector<32x1xf32>
    %7 = vector.extract_strided_slice %1 {offsets = [0, 15], sizes = [32, 8], strides = [1, 1]} : vector<32x23xf32> to vector<32x8xf32>
    %8 = tpu.iota {dimensions = array<i32: 1>} : vector<32x68xi32>
    %c34_i32 = arith.constant 34 : i32
    %c0_i32 = arith.constant 0 : i32
    %9 = arith.cmpi eq, %c34_i32, %c0_i32 : i32
    %c1_i32 = arith.constant 1 : i32
    %10 = arith.select %9, %c1_i32, %c34_i32 : i32
    %11 = vector.broadcast %10 : i32 to vector<32x68xi32>
    %12 = arith.remsi %8, %11 : vector<32x68xi32>
    %c0_i32_3 = arith.constant 0 : i32
    %13 = vector.broadcast %c0_i32_3 : i32 to vector<32x68xi32>
    %14 = arith.cmpi ne, %12, %13 : vector<32x68xi32>
    %c0_i32_4 = arith.constant 0 : i32
    %15 = vector.broadcast %c0_i32_4 : i32 to vector<32x68xi32>
    %16 = arith.cmpi slt, %12, %15 : vector<32x68xi32>
    %c0_i32_5 = arith.constant 0 : i32
    %17 = arith.cmpi slt, %10, %c0_i32_5 : i32
    %18 = vector.broadcast %17 : i1 to vector<32x68xi1>
    %19 = vector.broadcast %18 : vector<32x68xi1> to vector<32x68xi1>
    %20 = arith.xori %16, %19 : vector<32x68xi1>
    %21 = arith.andi %20, %14 : vector<32x68xi1>
    %22 = vector.broadcast %10 : i32 to vector<32x68xi32>
    %23 = arith.addi %12, %22 : vector<32x68xi32>
    %24 = arith.select %21, %23, %12 : vector<32x68xi1>, vector<32x68xi32>
    %c9_i32 = arith.constant 9 : i32
    %25 = vector.broadcast %c9_i32 : i32 to vector<32x68xi32>
    %26 = arith.cmpi sge, %24, %25 : vector<32x68xi32>
    %c25_i32 = arith.constant 25 : i32
    %27 = vector.broadcast %c25_i32 : i32 to vector<32x68xi32>
    %28 = arith.cmpi slt, %24, %27 : vector<32x68xi32>
    %29 = arith.andi %26, %28 : vector<32x68xi1>
    %cst = arith.constant 0.000000e+00 : f32
    %30 = vector.broadcast %cst : f32 to vector<32x68xf32>
    %c2_i32 = arith.constant 2 : i32
    %31 = tpu.dynamic_rotate %0 by %c2_i32 dim 1 : vector<32x68xf32>, i32 -> vector<32x68xf32>
    %32 = vector.extract_strided_slice %2 {offsets = [0, 0], sizes = [32, 1], strides = [1, 1]} : vector<32x5xf32> to vector<32x1xf32>
    %33 = vector.broadcast %32 : vector<32x1xf32> to vector<32x68xf32>
    %34 = arith.mulf %33, %31 : vector<32x68xf32>
    %35 = arith.addf %30, %34 : vector<32x68xf32>
    %c1_i32_6 = arith.constant 1 : i32
    %36 = tpu.dynamic_rotate %0 by %c1_i32_6 dim 1 : vector<32x68xf32>, i32 -> vector<32x68xf32>
    %37 = vector.extract_strided_slice %2 {offsets = [0, 1], sizes = [32, 1], strides = [1, 1]} : vector<32x5xf32> to vector<32x1xf32>
    %38 = vector.broadcast %37 : vector<32x1xf32> to vector<32x68xf32>
    %39 = arith.mulf %38, %36 : vector<32x68xf32>
    %40 = arith.addf %35, %39 : vector<32x68xf32>
    %c0_i32_7 = arith.constant 0 : i32
    %41 = tpu.dynamic_rotate %0 by %c0_i32_7 dim 1 : vector<32x68xf32>, i32 -> vector<32x68xf32>
    %42 = vector.extract_strided_slice %2 {offsets = [0, 2], sizes = [32, 1], strides = [1, 1]} : vector<32x5xf32> to vector<32x1xf32>
    %43 = vector.broadcast %42 : vector<32x1xf32> to vector<32x68xf32>
    %44 = arith.mulf %43, %41 : vector<32x68xf32>
    %45 = arith.addf %40, %44 : vector<32x68xf32>
    %c67_i32 = arith.constant 67 : i32
    %46 = tpu.dynamic_rotate %0 by %c67_i32 dim 1 : vector<32x68xf32>, i32 -> vector<32x68xf32>
    %47 = vector.extract_strided_slice %2 {offsets = [0, 3], sizes = [32, 1], strides = [1, 1]} : vector<32x5xf32> to vector<32x1xf32>
    %48 = vector.broadcast %47 : vector<32x1xf32> to vector<32x68xf32>
    %49 = arith.mulf %48, %46 : vector<32x68xf32>
    %50 = arith.addf %45, %49 : vector<32x68xf32>
    %c66_i32 = arith.constant 66 : i32
    %51 = tpu.dynamic_rotate %0 by %c66_i32 dim 1 : vector<32x68xf32>, i32 -> vector<32x68xf32>
    %52 = vector.extract_strided_slice %2 {offsets = [0, 4], sizes = [32, 1], strides = [1, 1]} : vector<32x5xf32> to vector<32x1xf32>
    %53 = vector.broadcast %52 : vector<32x1xf32> to vector<32x68xf32>
    %54 = arith.mulf %53, %51 : vector<32x68xf32>
    %55 = arith.addf %50, %54 : vector<32x68xf32>
    %56 = vector.broadcast %4 : vector<32x1xf32> to vector<32x68xf32>
    %57 = arith.addf %55, %56 : vector<32x68xf32>
    %cst_8 = arith.constant 0.000000e+00 : f32
    %58 = vector.broadcast %cst_8 : f32 to vector<32x68xf32>
    %59 = arith.select %29, %57, %58 : vector<32x68xi1>, vector<32x68xf32>
    %cst_9 = arith.constant 0.000000e+00 : f32
    %60 = vector.broadcast %cst_9 : f32 to vector<32x68xf32>
    %c9_i32_10 = arith.constant 9 : i32
    %61 = tpu.dynamic_rotate %59 by %c9_i32_10 dim 1 : vector<32x68xf32>, i32 -> vector<32x68xf32>
    %62 = vector.extract_strided_slice %3 {offsets = [0, 0], sizes = [32, 1], strides = [1, 1]} : vector<32x7xf32> to vector<32x1xf32>
    %63 = vector.broadcast %62 : vector<32x1xf32> to vector<32x68xf32>
    %64 = arith.mulf %63, %61 : vector<32x68xf32>
    %65 = arith.addf %60, %64 : vector<32x68xf32>
    %c6_i32 = arith.constant 6 : i32
    %66 = tpu.dynamic_rotate %59 by %c6_i32 dim 1 : vector<32x68xf32>, i32 -> vector<32x68xf32>
    %67 = vector.extract_strided_slice %3 {offsets = [0, 1], sizes = [32, 1], strides = [1, 1]} : vector<32x7xf32> to vector<32x1xf32>
    %68 = vector.broadcast %67 : vector<32x1xf32> to vector<32x68xf32>
    %69 = arith.mulf %68, %66 : vector<32x68xf32>
    %70 = arith.addf %65, %69 : vector<32x68xf32>
    %c3_i32 = arith.constant 3 : i32
    %71 = tpu.dynamic_rotate %59 by %c3_i32 dim 1 : vector<32x68xf32>, i32 -> vector<32x68xf32>
    %72 = vector.extract_strided_slice %3 {offsets = [0, 2], sizes = [32, 1], strides = [1, 1]} : vector<32x7xf32> to vector<32x1xf32>
    %73 = vector.broadcast %72 : vector<32x1xf32> to vector<32x68xf32>
    %74 = arith.mulf %73, %71 : vector<32x68xf32>
    %75 = arith.addf %70, %74 : vector<32x68xf32>
    %c0_i32_11 = arith.constant 0 : i32
    %76 = tpu.dynamic_rotate %59 by %c0_i32_11 dim 1 : vector<32x68xf32>, i32 -> vector<32x68xf32>
    %77 = vector.extract_strided_slice %3 {offsets = [0, 3], sizes = [32, 1], strides = [1, 1]} : vector<32x7xf32> to vector<32x1xf32>
    %78 = vector.broadcast %77 : vector<32x1xf32> to vector<32x68xf32>
    %79 = arith.mulf %78, %76 : vector<32x68xf32>
    %80 = arith.addf %75, %79 : vector<32x68xf32>
    %c65_i32 = arith.constant 65 : i32
    %81 = tpu.dynamic_rotate %59 by %c65_i32 dim 1 : vector<32x68xf32>, i32 -> vector<32x68xf32>
    %82 = vector.extract_strided_slice %3 {offsets = [0, 4], sizes = [32, 1], strides = [1, 1]} : vector<32x7xf32> to vector<32x1xf32>
    %83 = vector.broadcast %82 : vector<32x1xf32> to vector<32x68xf32>
    %84 = arith.mulf %83, %81 : vector<32x68xf32>
    %85 = arith.addf %80, %84 : vector<32x68xf32>
    %c62_i32 = arith.constant 62 : i32
    %86 = tpu.dynamic_rotate %59 by %c62_i32 dim 1 : vector<32x68xf32>, i32 -> vector<32x68xf32>
    %87 = vector.extract_strided_slice %3 {offsets = [0, 5], sizes = [32, 1], strides = [1, 1]} : vector<32x7xf32> to vector<32x1xf32>
    %88 = vector.broadcast %87 : vector<32x1xf32> to vector<32x68xf32>
    %89 = arith.mulf %88, %86 : vector<32x68xf32>
    %90 = arith.addf %85, %89 : vector<32x68xf32>
    %c59_i32 = arith.constant 59 : i32
    %91 = tpu.dynamic_rotate %59 by %c59_i32 dim 1 : vector<32x68xf32>, i32 -> vector<32x68xf32>
    %92 = vector.extract_strided_slice %3 {offsets = [0, 6], sizes = [32, 1], strides = [1, 1]} : vector<32x7xf32> to vector<32x1xf32>
    %93 = vector.broadcast %92 : vector<32x1xf32> to vector<32x68xf32>
    %94 = arith.mulf %93, %91 : vector<32x68xf32>
    %95 = arith.addf %90, %94 : vector<32x68xf32>
    %96 = vector.broadcast %5 : vector<32x1xf32> to vector<32x68xf32>
    %97 = arith.addf %95, %96 : vector<32x68xf32>
    %cst_12 = arith.constant 0.000000e+00 : f32
    %98 = vector.broadcast %cst_12 : f32 to vector<32x68xf32>
    %99 = arith.select %29, %97, %98 : vector<32x68xi1>, vector<32x68xf32>
    %c0_13 = arith.constant 0 : index
    %c0_14 = arith.constant 0 : index
    %100 = vector.load %arg2[%c0_13, %c0_14] : memref<32x32xf32, #tpu.memory_space<vmem>>, vector<32x32xf32>
    %cst_15 = arith.constant dense<0.000000e+00> : vector<32x68xf32>
    %101 = tpu.matmul %100, %99, %cst_15 {dimension_numbers = #tpu.dot_dimension_numbers<[1], [0], [0], [1], [0, 0, 1, 1], [], []>} : vector<32x32xf32>, vector<32x68xf32>, vector<32x68xf32> -> vector<32x68xf32>
    %102 = vector.broadcast %6 : vector<32x1xf32> to vector<32x68xf32>
    %103 = arith.addf %101, %102 : vector<32x68xf32>
    %c0_16 = arith.constant 0 : index
    %c0_17 = arith.constant 0 : index
    %104 = vector.load %arg5[%c0_16, %c0_17] : memref<68x2xf32, #tpu.memory_space<vmem>>, vector<68x2xf32>
    %cst_18 = arith.constant dense<0.000000e+00> : vector<32x2xf32>
    %105 = tpu.matmul %0, %104, %cst_18 {dimension_numbers = #tpu.dot_dimension_numbers<[1], [0], [0], [1], [0, 0, 1, 1], [], []>} : vector<32x68xf32>, vector<68x2xf32>, vector<32x2xf32> -> vector<32x2xf32>
    %c0_19 = arith.constant 0 : index
    %c0_20 = arith.constant 0 : index
    %106 = vector.load %arg3[%c0_19, %c0_20] : memref<8x32xf32, #tpu.memory_space<vmem>>, vector<8x32xf32>
    %cst_21 = arith.constant dense<0.000000e+00> : vector<8x2xf32>
    %107 = tpu.matmul %106, %105, %cst_21 {dimension_numbers = #tpu.dot_dimension_numbers<[1], [0], [0], [1], [0, 0, 1, 1], [], []>} : vector<8x32xf32>, vector<32x2xf32>, vector<8x2xf32> -> vector<8x2xf32>
    %cst_22 = arith.constant 0.000000e+00 : f32
    %108 = vector.broadcast %cst_22 : f32 to vector<8x2xf32>
    %109 = arith.maximumf %107, %108 : vector<8x2xf32>
    %cst_23 = arith.constant dense<0.000000e+00> : vector<32x2xf32>
    %110 = tpu.matmul %7, %109, %cst_23 {dimension_numbers = #tpu.dot_dimension_numbers<[1], [0], [0], [1], [0, 0, 1, 1], [], []>} : vector<32x8xf32>, vector<8x2xf32>, vector<32x2xf32> -> vector<32x2xf32>
    %111 = arith.negf %110 : vector<32x2xf32>
    %112 = math.exp %111 : vector<32x2xf32>
    %cst_24 = arith.constant 1.000000e+00 : f32
    %113 = vector.broadcast %cst_24 : f32 to vector<32x2xf32>
    %114 = arith.addf %113, %112 : vector<32x2xf32>
    %115 = arith.divf %113, %114 : vector<32x2xf32>
    %c0_25 = arith.constant 0 : index
    %c0_26 = arith.constant 0 : index
    %116 = vector.load %arg6[%c0_25, %c0_26] : memref<2x68xf32, #tpu.memory_space<vmem>>, vector<2x68xf32>
    %cst_27 = arith.constant dense<0.000000e+00> : vector<32x68xf32>
    %117 = tpu.matmul %115, %116, %cst_27 {dimension_numbers = #tpu.dot_dimension_numbers<[1], [0], [0], [1], [0, 0, 1, 1], [], []>} : vector<32x2xf32>, vector<2x68xf32>, vector<32x68xf32> -> vector<32x68xf32>
    %118 = arith.mulf %117, %103 : vector<32x68xf32>
    %119 = arith.mulf %118, %0 : vector<32x68xf32>
    %c0_28 = arith.constant 0 : index
    %c0_29 = arith.constant 0 : index
    %120 = vector.load %arg7[%c0_28, %c0_29] : memref<32x68xf32, #tpu.memory_space<vmem>>, vector<32x68xf32>
    tpu.vector_store %arg7[%c0_28, %c0_29], %119 {strides = array<i32>} : memref<32x68xf32, #tpu.memory_space<vmem>>, vector<32x68xf32>,
    return
  }
  func.func @transform_0(%arg0: i32) -> (i32, i32) {
    %c0_i32 = arith.constant 0 : i32
    %c0_i32_0 = arith.constant 0 : i32
    return %c0_i32, %arg0 : i32, i32
  }
  func.func @transform_1(%arg0: i32) -> (i32, i32) {
    %c0_i32 = arith.constant 0 : i32
    %c0_i32_0 = arith.constant 0 : i32
    %c0_i32_1 = arith.constant 0 : i32
    return %c0_i32, %c0_i32_0 : i32, i32
  }
  func.func @transform_2(%arg0: i32) -> (i32, i32) {
    %c0_i32 = arith.constant 0 : i32
    %c0_i32_0 = arith.constant 0 : i32
    %c0_i32_1 = arith.constant 0 : i32
    return %c0_i32, %c0_i32_0 : i32, i32
  }
  func.func @transform_3(%arg0: i32) -> (i32, i32) {
    %c0_i32 = arith.constant 0 : i32
    %c0_i32_0 = arith.constant 0 : i32
    %c0_i32_1 = arith.constant 0 : i32
    return %c0_i32, %c0_i32_0 : i32, i32
  }
  func.func @transform_4(%arg0: i32) -> (i32, i32) {
    %c0_i32 = arith.constant 0 : i32
    %c0_i32_0 = arith.constant 0 : i32
    %c0_i32_1 = arith.constant 0 : i32
    return %c0_i32, %c0_i32_0 : i32, i32
  }
  func.func @transform_5(%arg0: i32) -> (i32, i32) {
    %c0_i32 = arith.constant 0 : i32
    %c0_i32_0 = arith.constant 0 : i32
    %c0_i32_1 = arith.constant 0 : i32
    return %c0_i32, %c0_i32_0 : i32, i32
  }
  func.func @transform_6(%arg0: i32) -> (i32, i32) {
    %c0_i32 = arith.constant 0 : i32
    %c0_i32_0 = arith.constant 0 : i32
    return %c0_i32, %arg0 : i32, i32
  }
}

</mosaic_0001>

<llo_original>
// kernel: tpu_custom_call.1
$region0: #{tpu_custom_call.1}
  #allocation0 [shape = 'u32[]', space=smem, size = 0x4, offset = 0x4, fixed_abs, tag = 'smem constant byte address 0x4 - core index']
  #allocation1 [shape = 'u32[144,128]{1,0:T(1,128)}', space=vmem, size = 0x12000, scoped, tag = 'internal scratch']
  %s0 = inlined_call_operand.vmem [shape: f32[32,68], index: 0, kind: input, shape index: {}]
  %s1 = inlined_call_operand.vmem [shape: f32[32,32], index: 1, kind: input, shape index: {}]
  %s2 = inlined_call_operand.vmem [shape: f32[8,32], index: 2, kind: input, shape index: {}]
  %s3 = inlined_call_operand.vmem [shape: f32[32,23], index: 3, kind: input, shape index: {}]
  %s4 = inlined_call_operand.vmem [shape: f32[68,2], index: 4, kind: input, shape index: {}]
  %s5 = inlined_call_operand.vmem [shape: f32[2,68], index: 5, kind: input, shape index: {}]
  %s6 = inlined_call_operand.hbm [shape: f32[32,68], index: 6, kind: output, shape index: {}]
  %s7 = sld [smem:[#allocation0]]
  $region34: #{tpu_custom_call.1} parent=0
    _
  %s9 = ssub.s32 1, %s7
  %s10 = scalar_select 0, %s9, %s7
  $region1: #{tpu_custom_call.1} parent=0
    #allocation2 [shape = 'u8[16384]{0}', space=vmem, size = 0x4000, scoped, tag = 'output window, operand 0, single buffered']
    #allocation3 [shape = 's32[1]{0}', space=sflag, size = 0x4, scoped, tag = 'scoped memory for tpu_custom_call.1']
    %11 = vsyncpa [#allocation3], 0
    // Predicated region
    $region2: #{tpu_custom_call.1} parent=1 // pred_check
      _
    $region3: #{tpu_custom_call.1} parent=1 // pred_check_branch
      %13 = sbr.rel (0) target = $region5
    $region4: #{tpu_custom_call.1} parent=1 // pred_region
      _
    $region5: #{tpu_custom_call.1} parent=1 // pred_fallthru
      _
    // Predicated region
    $region6: #{tpu_custom_call.1} parent=1 // pred_check
      _
    $region7: #{tpu_custom_call.1} parent=1 // pred_check_branch
      %15 = sbr.rel (0) target = $region9
    $region8: #{tpu_custom_call.1} parent=1 // pred_region
      _
    $region9: #{tpu_custom_call.1} parent=1 // pred_fallthru
      _
    // Predicated region
    $region10: #{tpu_custom_call.1} parent=1 // pred_check
      _
    $region11: #{tpu_custom_call.1} parent=1 // pred_check_branch
      %17 = sbr.rel (0) target = $region13
    $region12: #{tpu_custom_call.1} parent=1 // pred_region
      _
    $region13: #{tpu_custom_call.1} parent=1 // pred_fallthru
      _
    // Predicated region
    $region14: #{tpu_custom_call.1} parent=1 // pred_check
      _
    $region15: #{tpu_custom_call.1} parent=1 // pred_check_branch
      %19 = sbr.rel (0) target = $region17
    $region16: #{tpu_custom_call.1} parent=1 // pred_region
      _
    $region17: #{tpu_custom_call.1} parent=1 // pred_fallthru
      _
    // Predicated region
    $region18: #{tpu_custom_call.1} parent=1 // pred_check
      _
    $region19: #{tpu_custom_call.1} parent=1 // pred_check_branch
      %21 = sbr.rel (0) target = $region21
    $region20: #{tpu_custom_call.1} parent=1 // pred_region
      _
    $region21: #{tpu_custom_call.1} parent=1 // pred_fallthru
      _
    // Predicated region
    $region22: #{tpu_custom_call.1} parent=1 // pred_check
      _
    $region23: #{tpu_custom_call.1} parent=1 // pred_check_branch
      %23 = sbr.rel (0) target = $region25
    $region24: #{tpu_custom_call.1} parent=1 // pred_region
      _
    $region25: #{tpu_custom_call.1} parent=1 // pred_fallthru
      _
    %v24 = vld [vmem:[%s0] sm:$0xff]
    %v25 = vld [vmem:[%s0 + $0x8] sm:$0xff]
    %v26 = vld [vmem:[%s0 + $0x10] sm:$0xff]
    %v27 = vld [vmem:[%s0 + $0x18] sm:$0xff]
    %v28 = vld [vmem:[%s3] sm:$0xff]
    %v29 = vld [vmem:[%s3 + $0x8] sm:$0xff]
    %v30 = vld [vmem:[%s3 + $0x10] sm:$0xff]
    %v31 = vld [vmem:[%s3 + $0x18] sm:$0xff]
    %v32 = vlaneseq
    %v33 = vand.u32 %v32, 127
    %vm34 = vcmp.lt.s32.totalorder %v33, 0
    %v35 = vsub.s32 0, %v33
    %v36 = vsel %vm34, %v35, %v33
    %v37 = vmul.u32.u64.compose %v36, 4042322161
    %v38 = vextract.low.u32 %v37
    %v39 = vextract.high.u32 %v37
    %v40 = vshrl.u32 %v39, 5
    %v41 = vmul.u32 %v40, 34
    %v42 = vsub.s32 %v36, %v41
    %v43 = vsub.s32 0, %v42
    %v44 = vsel %vm34, %v43, %v42
    %vm45 = vcmp.ne.s32.totalorder %v44, 0
    %vm46 = vcmp.lt.s32.totalorder %v44, 0
    %vm47 = vmand %vm46, %vm45
    %v48 = vadd.s32 %v44, 34
    %v49 = vsel %vm47, %v48, %v44
    %vm50 = vcmp.ge.s32.totalorder %v49, 9
    %vm51 = vcmp.lt.s32.totalorder %v49, 25
    %vm52 = vmand %vm50, %vm51
    %vm53 = vcmask 1048096
    %54 = vrot.lane.b32.xlu0 %v24, 68
    %v55 = vpop.permute.xlu0 %54
    %v56 = vsel %vm53, %v55, %v24
    %57 = vrot.lane.b32.xlu0 %v25, 68
    %v58 = vpop.permute.xlu0 %57
    %v59 = vsel %vm53, %v58, %v25
    %60 = vrot.lane.b32.xlu0 %v26, 68
    %v61 = vpop.permute.xlu0 %60
    %v62 = vsel %vm53, %v61, %v26
    %63 = vrot.lane.b32.xlu0 %v27, 68
    %v64 = vpop.permute.xlu0 %63
    %v65 = vsel %vm53, %v64, %v27
    %66 = vrot.lane.b32.xlu0 %v56, 68
    %v67 = vpop.permute.xlu0 %66
    %68 = vrot.lane.b32.xlu0 %v59, 68
    %v69 = vpop.permute.xlu0 %68
    %70 = vrot.lane.b32.xlu0 %v62, 68
    %v71 = vpop.permute.xlu0 %70
    %72 = vrot.lane.b32.xlu0 %v65, 68
    %v73 = vpop.permute.xlu0 %72
    %v74 = vsel %vm53, %v67, %v24
    %v75 = vsel %vm53, %v69, %v25
    %v76 = vsel %vm53, %v71, %v26
    %v77 = vsel %vm53, %v73, %v27
    %79 = vset.pattern.permute.xlu0 0
    %80 = vperm.xlu0 %79, %v28
    %v81 = vpop.permute.xlu0 %80
    %84 = vset.pattern.permute.xlu0 0
    %85 = vperm.xlu0 %84, %v29
    %v86 = vpop.permute.xlu0 %85
    %89 = vset.pattern.permute.xlu0 0
    %90 = vperm.xlu0 %89, %v30
    %v91 = vpop.permute.xlu0 %90
    %94 = vset.pattern.permute.xlu0 0
    %95 = vperm.xlu0 %94, %v31
    %v96 = vpop.permute.xlu0 %95
    %v98 = vmul.f32 %v81, %v74
    %v99 = vmul.f32 %v81, %v67
    %v100 = vmul.f32 %v86, %v75
    %v101 = vmul.f32 %v86, %v69
    %v102 = vmul.f32 %v91, %v76
    %v103 = vmul.f32 %v91, %v71
    %v104 = vmul.f32 %v96, %v77
    %v105 = vmul.f32 %v96, %v73
    %v106 = vadd.f32 %v98, 0.0
    %v107 = vadd.f32 %v99, 0.0
    %v108 = vadd.f32 %v100, 0.0
    %v109 = vadd.f32 %v101, 0.0
    %v110 = vadd.f32 %v102, 0.0
    %v111 = vadd.f32 %v103, 0.0
    %v112 = vadd.f32 %v104, 0.0
    %v113 = vadd.f32 %v105, 0.0
    %114 = vset.pattern.permute.xlu0 1
    %115 = vperm.xlu0 %114, %v28
    %v116 = vpop.permute.xlu0 %115
    %118 = vset.pattern.permute.xlu0 1
    %119 = vperm.xlu0 %118, %v29
    %v120 = vpop.permute.xlu0 %119
    %122 = vset.pattern.permute.xlu0 1
    %123 = vperm.xlu0 %122, %v30
    %v124 = vpop.permute.xlu0 %123
    %126 = vset.pattern.permute.xlu0 1
    %127 = vperm.xlu0 %126, %v31
    %v128 = vpop.permute.xlu0 %127
    %v130 = vmul.f32 %v116, %v74
    %v131 = vmul.f32 %v116, %v67
    %v132 = vmul.f32 %v120, %v75
    %v133 = vmul.f32 %v120, %v69
    %v134 = vmul.f32 %v124, %v76
    %v135 = vmul.f32 %v124, %v71
    %v136 = vmul.f32 %v128, %v77
    %v137 = vmul.f32 %v128, %v73
    %146 = vrot.lane.b32.xlu0 %v130, 127
    %v147 = vpop.permute.xlu0 %146
    %148 = vrot.lane.b32.xlu0 %v131, 127
    %v149 = vpop.permute.xlu0 %148
    %150 = vrot.lane.b32.xlu0 %v132, 127
    %v151 = vpop.permute.xlu0 %150
    %152 = vrot.lane.b32.xlu0 %v133, 127
    %v153 = vpop.permute.xlu0 %152
    %154 = vrot.lane.b32.xlu0 %v134, 127
    %v155 = vpop.permute.xlu0 %154
    %156 = vrot.lane.b32.xlu0 %v135, 127
    %v157 = vpop.permute.xlu0 %156
    %158 = vrot.lane.b32.xlu0 %v136, 127
    %v159 = vpop.permute.xlu0 %158
    %160 = vrot.lane.b32.xlu0 %v137, 127
    %v161 = vpop.permute.xlu0 %160
    %vm162 = vcmask 1039360
    %v163 = vsel %vm162, %v147, %v149
    %v164 = vsel %vm162, %v151, %v153
    %v165 = vsel %vm162, %v155, %v157
    %v166 = vsel %vm162, %v159, %v161
    %v175 = vadd.f32 %v106, %v163
    %v176 = vadd.f32 %v107, %v149
    %v177 = vadd.f32 %v108, %v164
    %v178 = vadd.f32 %v109, %v153
    %v179 = vadd.f32 %v110, %v165
    %v180 = vadd.f32 %v111, %v157
    %v181 = vadd.f32 %v112, %v166
    %v182 = vadd.f32 %v113, %v161
    %183 = vset.pattern.permute.xlu0 2
    %184 = vperm.xlu0 %183, %v28
    %v185 = vpop.permute.xlu0 %184
    %187 = vset.pattern.permute.xlu0 2
    %188 = vperm.xlu0 %187, %v29
    %v189 = vpop.permute.xlu0 %188
    %191 = vset.pattern.permute.xlu0 2
    %192 = vperm.xlu0 %191, %v30
    %v193 = vpop.permute.xlu0 %192
    %195 = vset.pattern.permute.xlu0 2
    %196 = vperm.xlu0 %195, %v31
    %v197 = vpop.permute.xlu0 %196
    %v199 = vmul.f32 %v185, %v74
    %v200 = vmul.f32 %v185, %v67
    %v201 = vmul.f32 %v189, %v75
    %v202 = vmul.f32 %v189, %v69
    %v203 = vmul.f32 %v193, %v76
    %v204 = vmul.f32 %v193, %v71
    %v205 = vmul.f32 %v197, %v77
    %v206 = vmul.f32 %v197, %v73
    %215 = vrot.lane.b32.xlu0 %v199, 126
    %v216 = vpop.permute.xlu0 %215
    %217 = vrot.lane.b32.xlu0 %v200, 126
    %v218 = vpop.permute.xlu0 %217
    %219 = vrot.lane.b32.xlu0 %v201, 126
    %v220 = vpop.permute.xlu0 %219
    %221 = vrot.lane.b32.xlu0 %v202, 126
    %v222 = vpop.permute.xlu0 %221
    %223 = vrot.lane.b32.xlu0 %v203, 126
    %v224 = vpop.permute.xlu0 %223
    %225 = vrot.lane.b32.xlu0 %v204, 126
    %v226 = vpop.permute.xlu0 %225
    %227 = vrot.lane.b32.xlu0 %v205, 126
    %v228 = vpop.permute.xlu0 %227
    %229 = vrot.lane.b32.xlu0 %v206, 126
    %v230 = vpop.permute.xlu0 %229
    %vm231 = vcmask 1031168
    %v232 = vsel %vm231, %v216, %v218
    %v233 = vsel %vm231, %v220, %v222
    %v234 = vsel %vm231, %v224, %v226
    %v235 = vsel %vm231, %v228, %v230
    %v244 = vadd.f32 %v175, %v232
    %v245 = vadd.f32 %v176, %v218
    %v246 = vadd.f32 %v177, %v233
    %v247 = vadd.f32 %v178, %v222
    %v248 = vadd.f32 %v179, %v234
    %v249 = vadd.f32 %v180, %v226
    %v250 = vadd.f32 %v181, %v235
    %v251 = vadd.f32 %v182, %v230
    %252 = vset.pattern.permute.xlu0 3
    %253 = vperm.xlu0 %252, %v28
    %v254 = vpop.permute.xlu0 %253
    %256 = vset.pattern.permute.xlu0 3
    %257 = vperm.xlu0 %256, %v29
    %v258 = vpop.permute.xlu0 %257
    %260 = vset.pattern.permute.xlu0 3
    %261 = vperm.xlu0 %260, %v30
    %v262 = vpop.permute.xlu0 %261
    %264 = vset.pattern.permute.xlu0 3
    %265 = vperm.xlu0 %264, %v31
    %v266 = vpop.permute.xlu0 %265
    %v268 = vmul.f32 %v254, %v74
    %v269 = vmul.f32 %v258, %v75
    %v270 = vmul.f32 %v262, %v76
    %v271 = vmul.f32 %v266, %v77
    %276 = vrot.lane.b32.xlu0 %v268, 65
    %v277 = vpop.permute.xlu0 %276
    %278 = vrot.lane.b32.xlu0 %v269, 65
    %v279 = vpop.permute.xlu0 %278
    %280 = vrot.lane.b32.xlu0 %v270, 65
    %v281 = vpop.permute.xlu0 %280
    %282 = vrot.lane.b32.xlu0 %v271, 65
    %v283 = vpop.permute.xlu0 %282
    %v288 = vadd.f32 %v244, %v277
    %v289 = vadd.f32 %v245, %v277
    %v290 = vadd.f32 %v246, %v279
    %v291 = vadd.f32 %v247, %v279
    %v292 = vadd.f32 %v248, %v281
    %v293 = vadd.f32 %v249, %v281
    %v294 = vadd.f32 %v250, %v283
    %v295 = vadd.f32 %v251, %v283
    %296 = vset.pattern.permute.xlu0 4
    %297 = vperm.xlu0 %296, %v28
    %v298 = vpop.permute.xlu0 %297
    %300 = vset.pattern.permute.xlu0 4
    %301 = vperm.xlu0 %300, %v29
    %v302 = vpop.permute.xlu0 %301
    %304 = vset.pattern.permute.xlu0 4
    %305 = vperm.xlu0 %304, %v30
    %v306 = vpop.permute.xlu0 %305
    %308 = vset.pattern.permute.xlu0 4
    %309 = vperm.xlu0 %308, %v31
    %v310 = vpop.permute.xlu0 %309
    %v312 = vmul.f32 %v298, %v74
    %v313 = vmul.f32 %v302, %v75
    %v314 = vmul.f32 %v306, %v76
    %v315 = vmul.f32 %v310, %v77
    %320 = vrot.lane.b32.xlu0 %v312, 64
    %v321 = vpop.permute.xlu0 %320
    %322 = vrot.lane.b32.xlu0 %v313, 64
    %v323 = vpop.permute.xlu0 %322
    %324 = vrot.lane.b32.xlu0 %v314, 64
    %v325 = vpop.permute.xlu0 %324
    %326 = vrot.lane.b32.xlu0 %v315, 64
    %v327 = vpop.permute.xlu0 %326
    %v332 = vadd.f32 %v288, %v321
    %v333 = vadd.f32 %v289, %v321
    %v334 = vadd.f32 %v290, %v323
    %v335 = vadd.f32 %v291, %v323
    %v336 = vadd.f32 %v292, %v325
    %v337 = vadd.f32 %v293, %v325
    %v338 = vadd.f32 %v294, %v327
    %v339 = vadd.f32 %v295, %v327
    %340 = vset.pattern.permute.xlu0 12
    %341 = vperm.xlu0 %340, %v28
    %v342 = vpop.permute.xlu0 %341
    %344 = vset.pattern.permute.xlu0 12
    %345 = vperm.xlu0 %344, %v29
    %v346 = vpop.permute.xlu0 %345
    %348 = vset.pattern.permute.xlu0 12
    %349 = vperm.xlu0 %348, %v30
    %v350 = vpop.permute.xlu0 %349
    %352 = vset.pattern.permute.xlu0 12
    %353 = vperm.xlu0 %352, %v31
    %v354 = vpop.permute.xlu0 %353
    %v356 = vadd.f32 %v332, %v342
    %v357 = vadd.f32 %v333, %v342
    %v358 = vadd.f32 %v334, %v346
    %v359 = vadd.f32 %v335, %v346
    %v360 = vadd.f32 %v336, %v350
    %v361 = vadd.f32 %v337, %v350
    %v362 = vadd.f32 %v338, %v354
    %v363 = vadd.f32 %v339, %v354
    %372 = vrot.lane.b32.xlu0 %v356, 62
    %v373 = vpop.permute.xlu0 %372
    %374 = vrot.lane.b32.xlu0 %v357, 62
    %v375 = vpop.permute.xlu0 %374
    %376 = vrot.lane.b32.xlu0 %v358, 62
    %v377 = vpop.permute.xlu0 %376
    %378 = vrot.lane.b32.xlu0 %v359, 62
    %v379 = vpop.permute.xlu0 %378
    %380 = vrot.lane.b32.xlu0 %v360, 62
    %v381 = vpop.permute.xlu0 %380
    %382 = vrot.lane.b32.xlu0 %v361, 62
    %v383 = vpop.permute.xlu0 %382
    %384 = vrot.lane.b32.xlu0 %v362, 62
    %v385 = vpop.permute.xlu0 %384
    %386 = vrot.lane.b32.xlu0 %v363, 62
    %v387 = vpop.permute.xlu0 %386
    %vm388 = vcmask 506880
    %v389 = vsel %vm388, %v373, %v375
    %v390 = vsel %vm388, %v377, %v379
    %v391 = vsel %vm388, %v381, %v383
    %v392 = vsel %vm388, %v385, %v387
    %v397 = vsel %vm52, %v389, 0.0
    %v398 = vsel %vm52, %v390, 0.0
    %v399 = vsel %vm52, %v391, 0.0
    %v400 = vsel %vm52, %v392, 0.0
    %401 = vrot.lane.b32.xlu0 %v397, 68
    %v402 = vpop.permute.xlu0 %401
    %v403 = vsel %vm53, %v402, %v397
    %404 = vrot.lane.b32.xlu0 %v398, 68
    %v405 = vpop.permute.xlu0 %404
    %v406 = vsel %vm53, %v405, %v398
    %407 = vrot.lane.b32.xlu0 %v399, 68
    %v408 = vpop.permute.xlu0 %407
    %v409 = vsel %vm53, %v408, %v399
    %410 = vrot.lane.b32.xlu0 %v400, 68
    %v411 = vpop.permute.xlu0 %410
    %v412 = vsel %vm53, %v411, %v400
    %413 = vrot.lane.b32.xlu0 %v403, 68
    %v414 = vpop.permute.xlu0 %413
    %415 = vrot.lane.b32.xlu0 %v406, 68
    %v416 = vpop.permute.xlu0 %415
    %417 = vrot.lane.b32.xlu0 %v409, 68
    %v418 = vpop.permute.xlu0 %417
    %419 = vrot.lane.b32.xlu0 %v412, 68
    %v420 = vpop.permute.xlu0 %419
    %v421 = vsel %vm53, %v414, %v397
    %v422 = vsel %vm53, %v416, %v398
    %v423 = vsel %vm53, %v418, %v399
    %v424 = vsel %vm53, %v420, %v400
    %425 = vset.pattern.permute.xlu0 5
    %426 = vperm.xlu0 %425, %v28
    %v427 = vpop.permute.xlu0 %426
    %429 = vset.pattern.permute.xlu0 5
    %430 = vperm.xlu0 %429, %v29
    %v431 = vpop.permute.xlu0 %430
    %433 = vset.pattern.permute.xlu0 5
    %434 = vperm.xlu0 %433, %v30
    %v435 = vpop.permute.xlu0 %434
    %437 = vset.pattern.permute.xlu0 5
    %438 = vperm.xlu0 %437, %v31
    %v439 = vpop.permute.xlu0 %438
    %v441 = vmul.f32 %v427, %v421
    %v442 = vmul.f32 %v431, %v422
    %v443 = vmul.f32 %v435, %v423
    %v444 = vmul.f32 %v439, %v424
    %v445 = vadd.f32 %v441, 0.0
    %v446 = vadd.f32 %v442, 0.0
    %v447 = vadd.f32 %v443, 0.0
    %v448 = vadd.f32 %v444, 0.0
    %449 = vset.pattern.permute.xlu0 6
    %450 = vperm.xlu0 %449, %v28
    %v451 = vpop.permute.xlu0 %450
    %453 = vset.pattern.permute.xlu0 6
    %454 = vperm.xlu0 %453, %v29
    %v455 = vpop.permute.xlu0 %454
    %457 = vset.pattern.permute.xlu0 6
    %458 = vperm.xlu0 %457, %v30
    %v459 = vpop.permute.xlu0 %458
    %461 = vset.pattern.permute.xlu0 6
    %462 = vperm.xlu0 %461, %v31
    %v463 = vpop.permute.xlu0 %462
    %v465 = vmul.f32 %v451, %v421
    %v466 = vmul.f32 %v451, %v414
    %v467 = vmul.f32 %v455, %v422
    %v468 = vmul.f32 %v455, %v416
    %v469 = vmul.f32 %v459, %v423
    %v470 = vmul.f32 %v459, %v418
    %v471 = vmul.f32 %v463, %v424
    %v472 = vmul.f32 %v463, %v420
    %481 = vrot.lane.b32.xlu0 %v465, 125
    %v482 = vpop.permute.xlu0 %481
    %483 = vrot.lane.b32.xlu0 %v466, 125
    %v484 = vpop.permute.xlu0 %483
    %485 = vrot.lane.b32.xlu0 %v467, 125
    %v486 = vpop.permute.xlu0 %485
    %487 = vrot.lane.b32.xlu0 %v468, 125
    %v488 = vpop.permute.xlu0 %487
    %489 = vrot.lane.b32.xlu0 %v469, 125
    %v490 = vpop.permute.xlu0 %489
    %491 = vrot.lane.b32.xlu0 %v470, 125
    %v492 = vpop.permute.xlu0 %491
    %493 = vrot.lane.b32.xlu0 %v471, 125
    %v494 = vpop.permute.xlu0 %493
    %495 = vrot.lane.b32.xlu0 %v472, 125
    %v496 = vpop.permute.xlu0 %495
    %vm497 = vcmask 1022976
    %v498 = vsel %vm497, %v482, %v484
    %v499 = vsel %vm497, %v486, %v488
    %v500 = vsel %vm497, %v490, %v492
    %v501 = vsel %vm497, %v494, %v496
    %v506 = vadd.f32 %v445, %v498
    %v507 = vadd.f32 %v446, %v499
    %v508 = vadd.f32 %v447, %v500
    %v509 = vadd.f32 %v448, %v501
    %510 = vset.pattern.permute.xlu0 7
    %511 = vperm.xlu0 %510, %v28
    %v512 = vpop.permute.xlu0 %511
    %514 = vset.pattern.permute.xlu0 7
    %515 = vperm.xlu0 %514, %v29
    %v516 = vpop.permute.xlu0 %515
    %518 = vset.pattern.permute.xlu0 7
    %519 = vperm.xlu0 %518, %v30
    %v520 = vpop.permute.xlu0 %519
    %522 = vset.pattern.permute.xlu0 7
    %523 = vperm.xlu0 %522, %v31
    %v524 = vpop.permute.xlu0 %523
    %v526 = vmul.f32 %v512, %v421
    %v527 = vmul.f32 %v512, %v414
    %v528 = vmul.f32 %v516, %v422
    %v529 = vmul.f32 %v516, %v416
    %v530 = vmul.f32 %v520, %v423
    %v531 = vmul.f32 %v520, %v418
    %v532 = vmul.f32 %v524, %v424
    %v533 = vmul.f32 %v524, %v420
    %542 = vrot.lane.b32.xlu0 %v526, 122
    %v543 = vpop.permute.xlu0 %542
    %544 = vrot.lane.b32.xlu0 %v527, 122
    %v545 = vpop.permute.xlu0 %544
    %546 = vrot.lane.b32.xlu0 %v528, 122
    %v547 = vpop.permute.xlu0 %546
    %548 = vrot.lane.b32.xlu0 %v529, 122
    %v549 = vpop.permute.xlu0 %548
    %550 = vrot.lane.b32.xlu0 %v530, 122
    %v551 = vpop.permute.xlu0 %550
    %552 = vrot.lane.b32.xlu0 %v531, 122
    %v553 = vpop.permute.xlu0 %552
    %554 = vrot.lane.b32.xlu0 %v532, 122
    %v555 = vpop.permute.xlu0 %554
    %556 = vrot.lane.b32.xlu0 %v533, 122
    %v557 = vpop.permute.xlu0 %556
    %vm558 = vcmask 998400
    %v559 = vsel %vm558, %v543, %v545
    %v560 = vsel %vm558, %v547, %v549
    %v561 = vsel %vm558, %v551, %v553
    %v562 = vsel %vm558, %v555, %v557
    %v567 = vadd.f32 %v506, %v559
    %v568 = vadd.f32 %v507, %v560
    %v569 = vadd.f32 %v508, %v561
    %v570 = vadd.f32 %v509, %v562
    %571 = vset.pattern.permute.xlu0 8
    %572 = vperm.xlu0 %571, %v28
    %v573 = vpop.permute.xlu0 %572
    %575 = vset.pattern.permute.xlu0 8
    %576 = vperm.xlu0 %575, %v29
    %v577 = vpop.permute.xlu0 %576
    %579 = vset.pattern.permute.xlu0 8
    %580 = vperm.xlu0 %579, %v30
    %v581 = vpop.permute.xlu0 %580
    %583 = vset.pattern.permute.xlu0 8
    %584 = vperm.xlu0 %583, %v31
    %v585 = vpop.permute.xlu0 %584
    %v587 = vmul.f32 %v573, %v421
    %v588 = vmul.f32 %v573, %v414
    %v589 = vmul.f32 %v577, %v422
    %v590 = vmul.f32 %v577, %v416
    %v591 = vmul.f32 %v581, %v423
    %v592 = vmul.f32 %v581, %v418
    %v593 = vmul.f32 %v585, %v424
    %v594 = vmul.f32 %v585, %v420
    %603 = vrot.lane.b32.xlu0 %v587, 119
    %v604 = vpop.permute.xlu0 %603
    %605 = vrot.lane.b32.xlu0 %v588, 119
    %v606 = vpop.permute.xlu0 %605
    %607 = vrot.lane.b32.xlu0 %v589, 119
    %v608 = vpop.permute.xlu0 %607
    %609 = vrot.lane.b32.xlu0 %v590, 119
    %v610 = vpop.permute.xlu0 %609
    %611 = vrot.lane.b32.xlu0 %v591, 119
    %v612 = vpop.permute.xlu0 %611
    %613 = vrot.lane.b32.xlu0 %v592, 119
    %v614 = vpop.permute.xlu0 %613
    %615 = vrot.lane.b32.xlu0 %v593, 119
    %v616 = vpop.permute.xlu0 %615
    %617 = vrot.lane.b32.xlu0 %v594, 119
    %v618 = vpop.permute.xlu0 %617
    %vm619 = vcmask 973824
    %v620 = vsel %vm619, %v604, %v606
    %v621 = vsel %vm619, %v608, %v610
    %v622 = vsel %vm619, %v612, %v614
    %v623 = vsel %vm619, %v616, %v618
    %v628 = vadd.f32 %v567, %v620
    %v629 = vadd.f32 %v568, %v621
    %v630 = vadd.f32 %v569, %v622
    %v631 = vadd.f32 %v570, %v623
    %632 = vset.pattern.permute.xlu0 9
    %633 = vperm.xlu0 %632, %v28
    %v634 = vpop.permute.xlu0 %633
    %636 = vset.pattern.permute.xlu0 9
    %637 = vperm.xlu0 %636, %v29
    %v638 = vpop.permute.xlu0 %637
    %640 = vset.pattern.permute.xlu0 9
    %641 = vperm.xlu0 %640, %v30
    %v642 = vpop.permute.xlu0 %641
    %644 = vset.pattern.permute.xlu0 9
    %645 = vperm.xlu0 %644, %v31
    %v646 = vpop.permute.xlu0 %645
    %v648 = vmul.f32 %v634, %v421
    %v649 = vmul.f32 %v638, %v422
    %v650 = vmul.f32 %v642, %v423
    %v651 = vmul.f32 %v646, %v424
    %656 = vrot.lane.b32.xlu0 %v648, 56
    %v657 = vpop.permute.xlu0 %656
    %658 = vrot.lane.b32.xlu0 %v649, 56
    %v659 = vpop.permute.xlu0 %658
    %660 = vrot.lane.b32.xlu0 %v650, 56
    %v661 = vpop.permute.xlu0 %660
    %662 = vrot.lane.b32.xlu0 %v651, 56
    %v663 = vpop.permute.xlu0 %662
    %v668 = vadd.f32 %v628, %v657
    %v669 = vadd.f32 %v629, %v659
    %v670 = vadd.f32 %v630, %v661
    %v671 = vadd.f32 %v631, %v663
    %672 = vset.pattern.permute.xlu0 10
    %673 = vperm.xlu0 %672, %v28
    %v674 = vpop.permute.xlu0 %673
    %676 = vset.pattern.permute.xlu0 10
    %677 = vperm.xlu0 %676, %v29
    %v678 = vpop.permute.xlu0 %677
    %680 = vset.pattern.permute.xlu0 10
    %681 = vperm.xlu0 %680, %v30
    %v682 = vpop.permute.xlu0 %681
    %684 = vset.pattern.permute.xlu0 10
    %685 = vperm.xlu0 %684, %v31
    %v686 = vpop.permute.xlu0 %685
    %v688 = vmul.f32 %v674, %v421
    %v689 = vmul.f32 %v678, %v422
    %v690 = vmul.f32 %v682, %v423
    %v691 = vmul.f32 %v686, %v424
    %696 = vrot.lane.b32.xlu0 %v688, 53
    %v697 = vpop.permute.xlu0 %696
    %698 = vrot.lane.b32.xlu0 %v689, 53
    %v699 = vpop.permute.xlu0 %698
    %700 = vrot.lane.b32.xlu0 %v690, 53
    %v701 = vpop.permute.xlu0 %700
    %702 = vrot.lane.b32.xlu0 %v691, 53
    %v703 = vpop.permute.xlu0 %702
    %v708 = vadd.f32 %v668, %v697
    %v709 = vadd.f32 %v669, %v699
    %v710 = vadd.f32 %v670, %v701
    %v711 = vadd.f32 %v671, %v703
    %712 = vset.pattern.permute.xlu0 11
    %713 = vperm.xlu0 %712, %v28
    %v714 = vpop.permute.xlu0 %713
    %716 = vset.pattern.permute.xlu0 11
    %717 = vperm.xlu0 %716, %v29
    %v718 = vpop.permute.xlu0 %717
    %720 = vset.pattern.permute.xlu0 11
    %721 = vperm.xlu0 %720, %v30
    %v722 = vpop.permute.xlu0 %721
    %724 = vset.pattern.permute.xlu0 11
    %725 = vperm.xlu0 %724, %v31
    %v726 = vpop.permute.xlu0 %725
    %v728 = vmul.f32 %v714, %v421
    %v729 = vmul.f32 %v718, %v422
    %v730 = vmul.f32 %v722, %v423
    %v731 = vmul.f32 %v726, %v424
    %736 = vrot.lane.b32.xlu0 %v728, 50
    %v737 = vpop.permute.xlu0 %736
    %738 = vrot.lane.b32.xlu0 %v729, 50
    %v739 = vpop.permute.xlu0 %738
    %740 = vrot.lane.b32.xlu0 %v730, 50
    %v741 = vpop.permute.xlu0 %740
    %742 = vrot.lane.b32.xlu0 %v731, 50
    %v743 = vpop.permute.xlu0 %742
    %v748 = vadd.f32 %v708, %v737
    %v749 = vadd.f32 %v709, %v739
    %v750 = vadd.f32 %v710, %v741
    %v751 = vadd.f32 %v711, %v743
    %752 = vset.pattern.permute.xlu0 13
    %753 = vperm.xlu0 %752, %v28
    %v754 = vpop.permute.xlu0 %753
    %756 = vset.pattern.permute.xlu0 13
    %757 = vperm.xlu0 %756, %v29
    %v758 = vpop.permute.xlu0 %757
    %760 = vset.pattern.permute.xlu0 13
    %761 = vperm.xlu0 %760, %v30
    %v762 = vpop.permute.xlu0 %761
    %764 = vset.pattern.permute.xlu0 13
    %765 = vperm.xlu0 %764, %v31
    %v766 = vpop.permute.xlu0 %765
    %v768 = vadd.f32 %v748, %v754
    %v769 = vadd.f32 %v749, %v758
    %v770 = vadd.f32 %v750, %v762
    %v771 = vadd.f32 %v751, %v766
    %776 = vrot.lane.b32.xlu0 %v768, 69
    %v777 = vpop.permute.xlu0 %776
    %778 = vrot.lane.b32.xlu0 %v769, 69
    %v779 = vpop.permute.xlu0 %778
    %780 = vrot.lane.b32.xlu0 %v770, 69
    %v781 = vpop.permute.xlu0 %780
    %782 = vrot.lane.b32.xlu0 %v771, 69
    %v783 = vpop.permute.xlu0 %782
    %v788 = vsel %vm52, %v777, 0.0
    %v789 = vsel %vm52, %v779, 0.0
    %v790 = vsel %vm52, %v781, 0.0
    %v791 = vsel %vm52, %v783, 0.0
    %v792 = vld [vmem:[%s1] sm:$0xff]
    %v793 = vld [vmem:[%s1 + $0x8] sm:$0xff]
    %v794 = vld [vmem:[%s1 + $0x10] sm:$0xff]
    %v795 = vld [vmem:[%s1 + $0x18] sm:$0xff]
    %796 = vset.pattern.permute.xlu0 14
    %797 = vperm.xlu0 %796, %v28
    %v798 = vpop.permute.xlu0 %797
    %800 = vset.pattern.permute.xlu0 14
    %801 = vperm.xlu0 %800, %v29
    %v802 = vpop.permute.xlu0 %801
    %804 = vset.pattern.permute.xlu0 14
    %805 = vperm.xlu0 %804, %v30
    %v806 = vpop.permute.xlu0 %805
    %808 = vset.pattern.permute.xlu0 14
    %809 = vperm.xlu0 %808, %v31
    %v810 = vpop.permute.xlu0 %809
    %vm812 = vcmask 261120
    %v814 = vsel %vm812, %v792, 0
    %v817 = vsel %vm812, %v793, 0
    %v820 = vsel %vm812, %v794, 0
    %v823 = vsel %vm812, %v795, 0
    %825 = vmatprep.subr.mxu0 0.0
    %826 = vmatpush1.msra.mxu0 0.0
    %827 = vmatprep.subr.mxu0 0.0
    %828 = vmatpush1.msra.mxu0 0.0
    %829 = vmatprep.subr.mxu0 0.0
    %830 = vmatpush1.msra.mxu0 0.0
    %831 = vmatprep.subr.mxu0 0.0
    %832 = vmatpush1.msra.mxu0 0.0
    %833 = vmatprep.subr.mxu0 0.0
    %834 = vmatpush1.msra.mxu0 0.0
    %835 = vmatprep.subr.mxu0 0.0
    %836 = vmatpush1.msra.mxu0 0.0
    %837 = vmatprep.subr.mxu0 0.0
    %838 = vmatpush1.msra.mxu0 0.0
    %839 = vmatprep.subr.mxu0 0.0
    %840 = vmatpush1.msra.mxu0 0.0
    %841 = vmatprep.subr.mxu0 0.0
    %842 = vmatpush1.msra.mxu0 0.0
    %843 = vmatprep.subr.mxu0 0.0
    %844 = vmatpush1.msra.mxu0 0.0
    %845 = vmatprep.subr.mxu0 0.0
    %846 = vmatpush1.msra.mxu0 0.0
    %847 = vmatprep.subr.mxu0 0.0
    %848 = vmatpush1.msra.mxu0 0.0
    %849 = vmatprep.subr.mxu0 0.0
    %850 = vmatpush1.msra.mxu0 %v791
    %851 = vmatprep.subr.mxu0 0.0
    %852 = vmatpush1.msra.mxu0 %v790
    %853 = vmatprep.subr.mxu0 0.0
    %854 = vmatpush1.msra.mxu0 %v789
    %855 = vmatprep.subr.mxu0 0.0
    %856 = vmatpush1.msra.mxu0 %v788
    %857 = vmatprep.subr.mxu0 0.0
    %858 = vmatpush2.msra.mxu0 0.0
    %859 = vmatprep.subr.mxu0 0.0
    %860 = vmatpush2.msra.mxu0 0.0
    %861 = vmatprep.subr.mxu0 0.0
    %862 = vmatpush2.msra.mxu0 0.0
    %863 = vmatprep.subr.mxu0 0.0
    %864 = vmatpush2.msra.mxu0 0.0
    %865 = vmatprep.subr.mxu0 0.0
    %866 = vmatpush2.msra.mxu0 0.0
    %867 = vmatprep.subr.mxu0 0.0
    %868 = vmatpush2.msra.mxu0 0.0
    %869 = vmatprep.subr.mxu0 0.0
    %870 = vmatpush2.msra.mxu0 0.0
    %871 = vmatprep.subr.mxu0 0.0
    %872 = vmatpush2.msra.mxu0 0.0
    %873 = vmatprep.subr.mxu0 0.0
    %874 = vmatpush2.msra.mxu0 0.0
    %875 = vmatprep.subr.mxu0 0.0
    %876 = vmatpush2.msra.mxu0 0.0
    %877 = vmatprep.subr.mxu0 0.0
    %878 = vmatpush2.msra.mxu0 0.0
    %879 = vmatprep.subr.mxu0 0.0
    %880 = vmatpush2.msra.mxu0 0.0
    %881 = vmatprep.subr.mxu0 0.0
    %882 = vmatpush2.msra.mxu0 0.0
    %883 = vmatprep.subr.mxu0 0.0
    %884 = vmatpush2.msra.mxu0 0.0
    %885 = vmatprep.subr.mxu0 0.0
    %886 = vmatpush2.msra.mxu0 0.0
    %887 = vmatprep.subr.mxu0 0.0
    %888 = vmatpush2.msra.mxu0 0.0
    %889 = vmatprep.mubr.f32.mxu0 0.0
    %890 = vmatmul.mubr.f32.gmra.mxu0 %v814
    %v891 = vpop.f32.mrf.mxu0
    %v892 = vadd.f32 %v798, %v891
    %v893 = vpop.f32.mrf.mxu0
    %894 = vmatprep.mubr.f32.mxu0 0.0
    %895 = vmatmul.mubr.f32.gmra.mxu0 %v817
    %v896 = vpop.f32.mrf.mxu0
    %v897 = vadd.f32 %v802, %v896
    %v898 = vpop.f32.mrf.mxu0
    %899 = vmatprep.mubr.f32.mxu0 0.0
    %900 = vmatmul.mubr.f32.gmra.mxu0 %v820
    %v901 = vpop.f32.mrf.mxu0
    %v902 = vadd.f32 %v806, %v901
    %v903 = vpop.f32.mrf.mxu0
    %904 = vmatprep.mubr.f32.mxu0 0.0
    %905 = vmatmul.mubr.f32.gmra.mxu0 %v823
    %v906 = vpop.f32.mrf.mxu0
    %v907 = vadd.f32 %v810, %v906
    %v908 = vpop.f32.mrf.mxu0
    %909 = vdwg.mxu0
    %v910 = vld [vmem:[%s4] sm:$0xff]
    %v911 = vld [vmem:[%s4 + $0x8] sm:$0xff]
    %v912 = vld [vmem:[%s4 + $0x10] sm:$0xff]
    %v913 = vld [vmem:[%s4 + $0x18] sm:$0xff]
    %v914 = vld [vmem:[%s4 + $0x20] sm:$0xff]
    %v915 = vld [vmem:[%s4 + $0x28] sm:$0xff]
    %v916 = vld [vmem:[%s4 + $0x30] sm:$0xff]
    %v917 = vld [vmem:[%s4 + $0x38] sm:$0xff]
    %v918 = vld [vmem:[%s4 + $0x40] sm:$0xf]
    %vm919 = vcmask 556032
    %v921 = vsel %vm919, %v24, 0
    %v924 = vsel %vm919, %v25, 0
    %v927 = vsel %vm919, %v26, 0
    %v930 = vsel %vm919, %v27, 0
    %vm932 = vcmask 1043456
    %v934 = vsel %vm932, %v918, 0
    %936 = vmatprep.subr.mxu0 0.0
    %937 = vmatpush1.msra.mxu0 0.0
    %938 = vmatprep.subr.mxu0 0.0
    %939 = vmatpush1.msra.mxu0 0.0
    %940 = vmatprep.subr.mxu0 0.0
    %941 = vmatpush1.msra.mxu0 0.0
    %942 = vmatprep.subr.mxu0 0.0
    %943 = vmatpush1.msra.mxu0 0.0
    %944 = vmatprep.subr.mxu0 0.0
    %945 = vmatpush1.msra.mxu0 0.0
    %946 = vmatprep.subr.mxu0 0.0
    %947 = vmatpush1.msra.mxu0 0.0
    %948 = vmatprep.subr.mxu0 0.0
    %949 = vmatpush1.msra.mxu0 0.0
    %950 = vmatprep.subr.mxu0 0.0
    %951 = vmatpush1.msra.mxu0 %v934
    %952 = vmatprep.subr.mxu0 0.0
    %953 = vmatpush1.msra.mxu0 %v917
    %954 = vmatprep.subr.mxu0 0.0
    %955 = vmatpush1.msra.mxu0 %v916
    %956 = vmatprep.subr.mxu0 0.0
    %957 = vmatpush1.msra.mxu0 %v915
    %958 = vmatprep.subr.mxu0 0.0
    %959 = vmatpush1.msra.mxu0 %v914
    %960 = vmatprep.subr.mxu0 0.0
    %961 = vmatpush1.msra.mxu0 %v913
    %962 = vmatprep.subr.mxu0 0.0
    %963 = vmatpush1.msra.mxu0 %v912
    %964 = vmatprep.subr.mxu0 0.0
    %965 = vmatpush1.msra.mxu0 %v911
    %966 = vmatprep.subr.mxu0 0.0
    %967 = vmatpush1.msra.mxu0 %v910
    %968 = vmatprep.subr.mxu0 0.0
    %969 = vmatpush2.msra.mxu0 0.0
    %970 = vmatprep.subr.mxu0 0.0
    %971 = vmatpush2.msra.mxu0 0.0
    %972 = vmatprep.subr.mxu0 0.0
    %973 = vmatpush2.msra.mxu0 0.0
    %974 = vmatprep.subr.mxu0 0.0
    %975 = vmatpush2.msra.mxu0 0.0
    %976 = vmatprep.subr.mxu0 0.0
    %977 = vmatpush2.msra.mxu0 0.0
    %978 = vmatprep.subr.mxu0 0.0
    %979 = vmatpush2.msra.mxu0 0.0
    %980 = vmatprep.subr.mxu0 0.0
    %981 = vmatpush2.msra.mxu0 0.0
    %982 = vmatprep.subr.mxu0 0.0
    %983 = vmatpush2.msra.mxu0 0.0
    %984 = vmatprep.subr.mxu0 0.0
    %985 = vmatpush2.msra.mxu0 0.0
    %986 = vmatprep.subr.mxu0 0.0
    %987 = vmatpush2.msra.mxu0 0.0
    %988 = vmatprep.subr.mxu0 0.0
    %989 = vmatpush2.msra.mxu0 0.0
    %990 = vmatprep.subr.mxu0 0.0
    %991 = vmatpush2.msra.mxu0 0.0
    %992 = vmatprep.subr.mxu0 0.0
    %993 = vmatpush2.msra.mxu0 0.0
    %994 = vmatprep.subr.mxu0 0.0
    %995 = vmatpush2.msra.mxu0 0.0
    %996 = vmatprep.subr.mxu0 0.0
    %997 = vmatpush2.msra.mxu0 0.0
    %998 = vmatprep.subr.mxu0 0.0
    %999 = vmatpush2.msra.mxu0 0.0
    %1000 = vmatprep.mubr.f32.mxu0 0.0
    %1001 = vmatmul.mubr.f32.gmra.mxu0 %v921
    %v1002 = vpop.f32.mrf.mxu0
    %v1003 = vadd.f32 0.0, %v1002
    %v1004 = vpop.f32.mrf.mxu0
    %1005 = vmatprep.mubr.f32.mxu0 0.0
    %1006 = vmatmul.mubr.f32.gmra.mxu0 %v924
    %v1007 = vpop.f32.mrf.mxu0
    %v1008 = vadd.f32 0.0, %v1007
    %v1009 = vpop.f32.mrf.mxu0
    %1010 = vmatprep.mubr.f32.mxu0 0.0
    %1011 = vmatmul.mubr.f32.gmra.mxu0 %v927
    %v1012 = vpop.f32.mrf.mxu0
    %v1013 = vadd.f32 0.0, %v1012
    %v1014 = vpop.f32.mrf.mxu0
    %1015 = vmatprep.mubr.f32.mxu0 0.0
    %1016 = vmatmul.mubr.f32.gmra.mxu0 %v930
    %v1017 = vpop.f32.mrf.mxu0
    %v1018 = vadd.f32 0.0, %v1017
    %v1019 = vpop.f32.mrf.mxu0
    %1020 = vdwg.mxu0
    %v1021 = vld [vmem:[%s2] sm:$0xff]
    %v1023 = vsel %vm812, %v1021, 0
    %1025 = vmatprep.subr.mxu0 0.0
    %1026 = vmatpush1.msra.mxu0 0.0
    %1027 = vmatprep.subr.mxu0 0.0
    %1028 = vmatpush1.msra.mxu0 0.0
    %1029 = vmatprep.subr.mxu0 0.0
    %1030 = vmatpush1.msra.mxu0 0.0
    %1031 = vmatprep.subr.mxu0 0.0
    %1032 = vmatpush1.msra.mxu0 0.0
    %1033 = vmatprep.subr.mxu0 0.0
    %1034 = vmatpush1.msra.mxu0 0.0
    %1035 = vmatprep.subr.mxu0 0.0
    %1036 = vmatpush1.msra.mxu0 0.0
    %1037 = vmatprep.subr.mxu0 0.0
    %1038 = vmatpush1.msra.mxu0 0.0
    %1039 = vmatprep.subr.mxu0 0.0
    %1040 = vmatpush1.msra.mxu0 0.0
    %1041 = vmatprep.subr.mxu0 0.0
    %1042 = vmatpush1.msra.mxu0 0.0
    %1043 = vmatprep.subr.mxu0 0.0
    %1044 = vmatpush1.msra.mxu0 0.0
    %1045 = vmatprep.subr.mxu0 0.0
    %1046 = vmatpush1.msra.mxu0 0.0
    %1047 = vmatprep.subr.mxu0 0.0
    %1048 = vmatpush1.msra.mxu0 0.0
    %1049 = vmatprep.subr.mxu0 0.0
    %1050 = vmatpush1.msra.mxu0 %v1018
    %1051 = vmatprep.subr.mxu0 0.0
    %1052 = vmatpush1.msra.mxu0 %v1013
    %1053 = vmatprep.subr.mxu0 0.0
    %1054 = vmatpush1.msra.mxu0 %v1008
    %1055 = vmatprep.subr.mxu0 0.0
    %1056 = vmatpush1.msra.mxu0 %v1003
    %1057 = vmatprep.subr.mxu0 0.0
    %1058 = vmatpush2.msra.mxu0 0.0
    %1059 = vmatprep.subr.mxu0 0.0
    %1060 = vmatpush2.msra.mxu0 0.0
    %1061 = vmatprep.subr.mxu0 0.0
    %1062 = vmatpush2.msra.mxu0 0.0
    %1063 = vmatprep.subr.mxu0 0.0
    %1064 = vmatpush2.msra.mxu0 0.0
    %1065 = vmatprep.subr.mxu0 0.0
    %1066 = vmatpush2.msra.mxu0 0.0
    %1067 = vmatprep.subr.mxu0 0.0
    %1068 = vmatpush2.msra.mxu0 0.0
    %1069 = vmatprep.subr.mxu0 0.0
    %1070 = vmatpush2.msra.mxu0 0.0
    %1071 = vmatprep.subr.mxu0 0.0
    %1072 = vmatpush2.msra.mxu0 0.0
    %1073 = vmatprep.subr.mxu0 0.0
    %1074 = vmatpush2.msra.mxu0 0.0
    %1075 = vmatprep.subr.mxu0 0.0
    %1076 = vmatpush2.msra.mxu0 0.0
    %1077 = vmatprep.subr.mxu0 0.0
    %1078 = vmatpush2.msra.mxu0 0.0
    %1079 = vmatprep.subr.mxu0 0.0
    %1080 = vmatpush2.msra.mxu0 0.0
    %1081 = vmatprep.subr.mxu0 0.0
    %1082 = vmatpush2.msra.mxu0 0.0
    %1083 = vmatprep.subr.mxu0 0.0
    %1084 = vmatpush2.msra.mxu0 0.0
    %1085 = vmatprep.subr.mxu0 0.0
    %1086 = vmatpush2.msra.mxu0 0.0
    %1087 = vmatprep.subr.mxu0 0.0
    %1088 = vmatpush2.msra.mxu0 0.0
    %1089 = vmatprep.mubr.f32.mxu0 0.0
    %1090 = vmatmul.mubr.f32.gmra.mxu0 %v1023
    %v1091 = vpop.f32.mrf.mxu0
    %v1092 = vadd.f32 0.0, %v1091
    %v1093 = vpop.f32.mrf.mxu0
    %1094 = vdwg.mxu0
    %v1095 = vmax.f32 %v1092, 0.0
    %1096 = vrot.lane.b32.xlu0 %v28, 113
    %v1097 = vpop.permute.xlu0 %1096
    %1098 = vrot.lane.b32.xlu0 %v29, 113
    %v1099 = vpop.permute.xlu0 %1098
    %1100 = vrot.lane.b32.xlu0 %v30, 113
    %v1101 = vpop.permute.xlu0 %1100
    %1102 = vrot.lane.b32.xlu0 %v31, 113
    %v1103 = vpop.permute.xlu0 %1102
    %vm1104 = vcmask 64512
    %v1105 = vsel %vm1104, %v1097, 0
    %v1107 = vsel %vm1104, %v1099, 0
    %v1109 = vsel %vm1104, %v1101, 0
    %v1111 = vsel %vm1104, %v1103, 0
    %1113 = vmatprep.subr.mxu0 0.0
    %1114 = vmatpush1.msra.mxu0 0.0
    %1115 = vmatprep.subr.mxu0 0.0
    %1116 = vmatpush1.msra.mxu0 0.0
    %1117 = vmatprep.subr.mxu0 0.0
    %1118 = vmatpush1.msra.mxu0 0.0
    %1119 = vmatprep.subr.mxu0 0.0
    %1120 = vmatpush1.msra.mxu0 0.0
    %1121 = vmatprep.subr.mxu0 0.0
    %1122 = vmatpush1.msra.mxu0 0.0
    %1123 = vmatprep.subr.mxu0 0.0
    %1124 = vmatpush1.msra.mxu0 0.0
    %1125 = vmatprep.subr.mxu0 0.0
    %1126 = vmatpush1.msra.mxu0 0.0
    %1127 = vmatprep.subr.mxu0 0.0
    %1128 = vmatpush1.msra.mxu0 0.0
    %1129 = vmatprep.subr.mxu0 0.0
    %1130 = vmatpush1.msra.mxu0 0.0
    %1131 = vmatprep.subr.mxu0 0.0
    %1132 = vmatpush1.msra.mxu0 0.0
    %1133 = vmatprep.subr.mxu0 0.0
    %1134 = vmatpush1.msra.mxu0 0.0
    %1135 = vmatprep.subr.mxu0 0.0
    %1136 = vmatpush1.msra.mxu0 0.0
    %1137 = vmatprep.subr.mxu0 0.0
    %1138 = vmatpush1.msra.mxu0 0.0
    %1139 = vmatprep.subr.mxu0 0.0
    %1140 = vmatpush1.msra.mxu0 0.0
    %1141 = vmatprep.subr.mxu0 0.0
    %1142 = vmatpush1.msra.mxu0 0.0
    %1143 = vmatprep.subr.mxu0 0.0
    %1144 = vmatpush1.msra.mxu0 %v1095
    %1145 = vmatprep.subr.mxu0 0.0
    %1146 = vmatpush2.msra.mxu0 0.0
    %1147 = vmatprep.subr.mxu0 0.0
    %1148 = vmatpush2.msra.mxu0 0.0
    %1149 = vmatprep.subr.mxu0 0.0
    %1150 = vmatpush2.msra.mxu0 0.0
    %1151 = vmatprep.subr.mxu0 0.0
    %1152 = vmatpush2.msra.mxu0 0.0
    %1153 = vmatprep.subr.mxu0 0.0
    %1154 = vmatpush2.msra.mxu0 0.0
    %1155 = vmatprep.subr.mxu0 0.0
    %1156 = vmatpush2.msra.mxu0 0.0
    %1157 = vmatprep.subr.mxu0 0.0
    %1158 = vmatpush2.msra.mxu0 0.0
    %1159 = vmatprep.subr.mxu0 0.0
    %1160 = vmatpush2.msra.mxu0 0.0
    %1161 = vmatprep.subr.mxu0 0.0
    %1162 = vmatpush2.msra.mxu0 0.0
    %1163 = vmatprep.subr.mxu0 0.0
    %1164 = vmatpush2.msra.mxu0 0.0
    %1165 = vmatprep.subr.mxu0 0.0
    %1166 = vmatpush2.msra.mxu0 0.0
    %1167 = vmatprep.subr.mxu0 0.0
    %1168 = vmatpush2.msra.mxu0 0.0
    %1169 = vmatprep.subr.mxu0 0.0
    %1170 = vmatpush2.msra.mxu0 0.0
    %1171 = vmatprep.subr.mxu0 0.0
    %1172 = vmatpush2.msra.mxu0 0.0
    %1173 = vmatprep.subr.mxu0 0.0
    %1174 = vmatpush2.msra.mxu0 0.0
    %1175 = vmatprep.subr.mxu0 0.0
    %1176 = vmatpush2.msra.mxu0 0.0
    %1177 = vmatprep.mubr.f32.mxu0 0.0
    %1178 = vmatmul.mubr.f32.gmra.mxu0 %v1105
    %v1179 = vpop.f32.mrf.mxu0
    %v1180 = vadd.f32 0.0, %v1179
    %v1181 = vpop.f32.mrf.mxu0
    %1182 = vmatprep.mubr.f32.mxu0 0.0
    %1183 = vmatmul.mubr.f32.gmra.mxu0 %v1107
    %v1184 = vpop.f32.mrf.mxu0
    %v1185 = vadd.f32 0.0, %v1184
    %v1186 = vpop.f32.mrf.mxu0
    %1187 = vmatprep.mubr.f32.mxu0 0.0
    %1188 = vmatmul.mubr.f32.gmra.mxu0 %v1109
    %v1189 = vpop.f32.mrf.mxu0
    %v1190 = vadd.f32 0.0, %v1189
    %v1191 = vpop.f32.mrf.mxu0
    %1192 = vmatprep.mubr.f32.mxu0 0.0
    %1193 = vmatmul.mubr.f32.gmra.mxu0 %v1111
    %v1194 = vpop.f32.mrf.mxu0
    %v1195 = vadd.f32 0.0, %v1194
    %v1196 = vpop.f32.mrf.mxu0
    %1197 = vdwg.mxu0
    %v1198 = vxor.u32 %v1180, 2147483648
    %v1199 = vxor.u32 %v1185, 2147483648
    %v1200 = vxor.u32 %v1190, 2147483648
    %v1201 = vxor.u32 %v1195, 2147483648
    %v1202 = vmul.f32 %v1198, 1.442695
    %v1203 = vpow.pop %v1202
    %v1204 = vmul.f32 %v1199, 1.442695
    %v1205 = vpow.pop %v1204
    %v1206 = vmul.f32 %v1200, 1.442695
    %v1207 = vpow.pop %v1206
    %v1208 = vmul.f32 %v1201, 1.442695
    %v1209 = vpow.pop %v1208
    %v1210 = vadd.f32 %v1203, 1.0
    %v1211 = vadd.f32 %v1205, 1.0
    %v1212 = vadd.f32 %v1207, 1.0
    %v1213 = vadd.f32 %v1209, 1.0
    %v1214 = vrcp.pop %v1210
    %v1215 = vmul.f32 1.0, %v1214
    %v1216 = vrcp.pop %v1211
    %v1217 = vmul.f32 1.0, %v1216
    %v1218 = vrcp.pop %v1212
    %v1219 = vmul.f32 1.0, %v1218
    %v1220 = vrcp.pop %v1213
    %v1221 = vmul.f32 1.0, %v1220
    %v1222 = vld [vmem:[%s5] sm:$0x3]
    %vm1223 = vcmask 15360
    %v1225 = vsel %vm1223, %v1215, 0
    %v1228 = vsel %vm1223, %v1217, 0
    %v1231 = vsel %vm1223, %v1219, 0
    %v1234 = vsel %vm1223, %v1221, 0
    %vm1236 = vcmask 1041408
    %v1238 = vsel %vm1236, %v1222, 0
    %1240 = vmatprep.subr.mxu0 0.0
    %1241 = vmatpush1.msra.mxu0 0.0
    %1242 = vmatprep.subr.mxu0 0.0
    %1243 = vmatpush1.msra.mxu0 0.0
    %1244 = vmatprep.subr.mxu0 0.0
    %1245 = vmatpush1.msra.mxu0 0.0
    %1246 = vmatprep.subr.mxu0 0.0
    %1247 = vmatpush1.msra.mxu0 0.0
    %1248 = vmatprep.subr.mxu0 0.0
    %1249 = vmatpush1.msra.mxu0 0.0
    %1250 = vmatprep.subr.mxu0 0.0
    %1251 = vmatpush1.msra.mxu0 0.0
    %1252 = vmatprep.subr.mxu0 0.0
    %1253 = vmatpush1.msra.mxu0 0.0
    %1254 = vmatprep.subr.mxu0 0.0
    %1255 = vmatpush1.msra.mxu0 0.0
    %1256 = vmatprep.subr.mxu0 0.0
    %1257 = vmatpush1.msra.mxu0 0.0
    %1258 = vmatprep.subr.mxu0 0.0
    %1259 = vmatpush1.msra.mxu0 0.0
    %1260 = vmatprep.subr.mxu0 0.0
    %1261 = vmatpush1.msra.mxu0 0.0
    %1262 = vmatprep.subr.mxu0 0.0
    %1263 = vmatpush1.msra.mxu0 0.0
    %1264 = vmatprep.subr.mxu0 0.0
    %1265 = vmatpush1.msra.mxu0 0.0
    %1266 = vmatprep.subr.mxu0 0.0
    %1267 = vmatpush1.msra.mxu0 0.0
    %1268 = vmatprep.subr.mxu0 0.0
    %1269 = vmatpush1.msra.mxu0 0.0
    %1270 = vmatprep.subr.mxu0 0.0
    %1271 = vmatpush1.msra.mxu0 %v1238
    %1272 = vmatprep.subr.mxu0 0.0
    %1273 = vmatpush2.msra.mxu0 0.0
    %1274 = vmatprep.subr.mxu0 0.0
    %1275 = vmatpush2.msra.mxu0 0.0
    %1276 = vmatprep.subr.mxu0 0.0
    %1277 = vmatpush2.msra.mxu0 0.0
    %1278 = vmatprep.subr.mxu0 0.0
    %1279 = vmatpush2.msra.mxu0 0.0
    %1280 = vmatprep.subr.mxu0 0.0
    %1281 = vmatpush2.msra.mxu0 0.0
    %1282 = vmatprep.subr.mxu0 0.0
    %1283 = vmatpush2.msra.mxu0 0.0
    %1284 = vmatprep.subr.mxu0 0.0
    %1285 = vmatpush2.msra.mxu0 0.0
    %1286 = vmatprep.subr.mxu0 0.0
    %1287 = vmatpush2.msra.mxu0 0.0
    %1288 = vmatprep.subr.mxu0 0.0
    %1289 = vmatpush2.msra.mxu0 0.0
    %1290 = vmatprep.subr.mxu0 0.0
    %1291 = vmatpush2.msra.mxu0 0.0
    %1292 = vmatprep.subr.mxu0 0.0
    %1293 = vmatpush2.msra.mxu0 0.0
    %1294 = vmatprep.subr.mxu0 0.0
    %1295 = vmatpush2.msra.mxu0 0.0
    %1296 = vmatprep.subr.mxu0 0.0
    %1297 = vmatpush2.msra.mxu0 0.0
    %1298 = vmatprep.subr.mxu0 0.0
    %1299 = vmatpush2.msra.mxu0 0.0
    %1300 = vmatprep.subr.mxu0 0.0
    %1301 = vmatpush2.msra.mxu0 0.0
    %1302 = vmatprep.subr.mxu0 0.0
    %1303 = vmatpush2.msra.mxu0 0.0
    %1304 = vmatprep.mubr.f32.mxu0 0.0
    %1305 = vmatmul.mubr.f32.gmra.mxu0 %v1225
    %v1306 = vpop.f32.mrf.mxu0
    %v1307 = vadd.f32 0.0, %v1306
    %v1308 = vpop.f32.mrf.mxu0
    %1309 = vmatprep.mubr.f32.mxu0 0.0
    %1310 = vmatmul.mubr.f32.gmra.mxu0 %v1228
    %v1311 = vpop.f32.mrf.mxu0
    %v1312 = vadd.f32 0.0, %v1311
    %v1313 = vpop.f32.mrf.mxu0
    %1314 = vmatprep.mubr.f32.mxu0 0.0
    %1315 = vmatmul.mubr.f32.gmra.mxu0 %v1231
    %v1316 = vpop.f32.mrf.mxu0
    %v1317 = vadd.f32 0.0, %v1316
    %v1318 = vpop.f32.mrf.mxu0
    %1319 = vmatprep.mubr.f32.mxu0 0.0
    %1320 = vmatmul.mubr.f32.gmra.mxu0 %v1234
    %v1321 = vpop.f32.mrf.mxu0
    %v1322 = vadd.f32 0.0, %v1321
    %v1323 = vpop.f32.mrf.mxu0
    %1324 = vdwg.mxu0
    %v1325 = vmul.f32 %v1307, %v892
    %v1326 = vmul.f32 %v1312, %v897
    %v1327 = vmul.f32 %v1317, %v902
    %v1328 = vmul.f32 %v1322, %v907
    %v1329 = vmul.f32 %v1325, %v24
    %v1330 = vmul.f32 %v1326, %v25
    %v1331 = vmul.f32 %v1327, %v26
    %v1332 = vmul.f32 %v1328, %v27
    %1333 = vst.msk [vmem:[#allocation2] sm:$0xff] %vm919, %v1329
    %1334 = vst.msk [vmem:[#allocation2 + $0x8] sm:$0xff] %vm919, %v1330
    %1335 = vst.msk [vmem:[#allocation2 + $0x10] sm:$0xff] %vm919, %v1331
    %1336 = vst.msk [vmem:[#allocation2 + $0x18] sm:$0xff] %vm919, %v1332
    // Predicated region
    $region26: #{tpu_custom_call.1} parent=1 // pred_check
      _
    $region27: #{tpu_custom_call.1} parent=1 // pred_check_branch
      %1338 = sbr.rel (0) target = $region29
    $region28: #{tpu_custom_call.1} parent=1 // pred_region
      %s1340 = ssub.s32 512, 512
      %1341 = vsyncadd [#allocation3], %s1340
      %s1342 = sshll.u32 [#allocation2], 4
      %s1343 = int_to_ptr.vmem [resolvable:$true] %s1342
      %1348 = dma.vmem_to_hbm [thread:$0]  %s1343, 512, %s6, [#allocation3], 128, 128, 8
    $region29: #{tpu_custom_call.1} parent=1 // pred_fallthru
      _
    // Predicated region
    $region30: #{tpu_custom_call.1} parent=1 // pred_check
      _
    $region31: #{tpu_custom_call.1} parent=1 // pred_check_branch
      %1350 = sbr.rel (0) target = $region33
    $region32: #{tpu_custom_call.1} parent=1 // pred_region
      %1351 = dma.done [#allocation3], 512
    $region33: #{tpu_custom_call.1} parent=1 // pred_fallthru
      _
    %1352 = vsyncpa [#allocation3], 1

</llo_original>
